<compile_context>
chip_gen: v7x
topology: tpu7x:2x2x1
jax: 0.10.0
libtpu: 0.0.40
codegen_flags: <defaults>
</compile_context>

<pallas_src>
import functools

import jax
import jax.numpy as jnp
from jax.experimental import pallas as pl
from jax.experimental.pallas import tpu as pltpu


# -----------------------------------------------------------------------------
# Kernel: 7 fused layers (the 12->3->12 bottleneck is folded in the wrapper).
# -----------------------------------------------------------------------------
def _ae_kernel(x_ref,
               w1, w2, w3, w45, w6, w7, w8,      # weights (in, out), io dtype
               b1, b2, b3, b45, b6, b7, b8,      # biases  (1, out), f32
               o_ref, *, compute_dtype):
    h = x_ref[...]

    def lin(h, w_ref, b_ref, out_dtype):
        # MXU operands in the weight (I/O) dtype, f32 accumulation; the
        # elementwise epilogue runs in `out_dtype`.
        acc = jnp.dot(h.astype(w_ref.dtype), w_ref[...],
                      preferred_element_type=jnp.float32)
        return acc.astype(out_dtype) + b_ref[...].astype(out_dtype)

    # encoder: in -> 128 -> 32 -> 12, ReLU after each
    h = jnp.maximum(lin(h, w1, b1, compute_dtype), 0.0)
    h = jnp.maximum(lin(h, w2, b2, compute_dtype), 0.0)
    h = jnp.maximum(lin(h, w3, b3, compute_dtype), 0.0)
    # folded 12 -> (3) -> 12 (exact: no activation between them), then decoder ReLU
    h = jnp.maximum(lin(h, w45, b45, compute_dtype), 0.0)
    # decoder: 12 -> 32 -> 128 -> in, ReLU, ReLU, Tanh
    h = jnp.maximum(lin(h, w6, b6, compute_dtype), 0.0)
    h = jnp.maximum(lin(h, w7, b7, compute_dtype), 0.0)
    # final bias-add + tanh in f32 (once per tile, negligible cost)
    h = jnp.tanh(lin(h, w8, b8, jnp.float32))

    o_ref[...] = h.astype(o_ref.dtype)


# -----------------------------------------------------------------------------
# Generation / VMEM helpers.
# -----------------------------------------------------------------------------
def _tpu_info():
    """Return (vmem_capacity_bytes, tensorcores_per_chip, has_native_bf16_vpu).

    Hardware query only (never wraps kernel execution) -> a conservative
    fallback on failure is safe.
    """
    vmem_cap = None
    try:
        vmem_cap = int(pltpu.get_tpu_info().vmem_capacity_bytes)
    except Exception:
        vmem_cap = None

    kind = ""
    try:
        kind = jax.devices()[0].device_kind.lower()
    except Exception:
        kind = ""

    is_v7 = ("v7" in kind) or ("tpu7" in kind) or ("7x" in kind)
    is_v5 = "v5" in kind
    if vmem_cap is None:
        vmem_cap = (64 << 20) if is_v7 else (128 << 20)
    num_tc = 2 if is_v7 else 1            # v7x: 2 TensorCores per chip
    has_bf16_vpu = not is_v5              # v5e has no native bf16 VPU/EUP
    return vmem_cap, num_tc, has_bf16_vpu


def _vmem_ceiling(vmem_cap):
    # Headroom under physical capacity for compiler scratch / semaphores.
    if vmem_cap <= (64 << 20):            # v7x (64 MiB per TC)
        return 40 << 20
    return 96 << 20                       # v5e / v6e (128 MiB)


def _pick_batch_tile(B, D_pad, io_itemsize, out_itemsize, param_bytes,
                     vmem_cap, num_tc):
    """Largest divisor of B that fits the generation-aware VMEM budget,
    sublane-aligned to the I/O dtype, preferring MXU-friendly multiples of
    256/128.  On v7x the grid step count must be even (2 TCs)."""
    sub = max(8, 32 // min(io_itemsize, out_itemsize))   # 8 f32, 16 bf16
    if B < 2 * sub or B % sub != 0:
        return B                          # single full-batch block

    # Per-row VMEM: double-buffered x (io dtype) + out (out dtype) tiles plus
    # ~3 live f32 intermediates of width max(D_pad, 128).
    per_row = 2 * D_pad * (io_itemsize + out_itemsize) + 3 * max(D_pad, 128) * 4
    budget = _vmem_ceiling(vmem_cap) - 2 * param_bytes - (4 << 20)
    cap = max(sub, min(2048, budget // max(1, per_row)))
    if num_tc > 1:
        cap = min(cap, B // 2)            # >= 2 steps so both TCs get work
    cap = min(cap, B)                     # single TC: single step allowed if it fits

    def search(require_even_steps):
        best = None
        for t in range(sub, cap + 1, sub):
            if B % t:
                continue
            if require_even_steps and (B // t) % num_tc:
                continue
            score = (t % 256 == 0, t % 128 == 0, t)
            if best is None or score > best[0]:
                best = (score, t)
        return None if best is None else best[1]

    t = search(num_tc > 1)
    if t is None:
        t = search(False)
    return t if t is not None else B


def _vmem_limit_bytes(batch_tile, D_pad, io_itemsize, out_itemsize,
                      param_bytes, vmem_cap):
    io_bytes = 2 * batch_tile * D_pad * (io_itemsize + out_itemsize)
    act_bytes = 3 * batch_tile * max(D_pad, 128) * 4    # f32 live intermediates
    need = io_bytes + 2 * param_bytes + act_bytes + (4 << 20)
    return int(min(max(need, 16 << 20), _vmem_ceiling(vmem_cap)))


# -----------------------------------------------------------------------------
# Wrapper.
# -----------------------------------------------------------------------------
def autoencoder_forward(x, params, *, io_dtype=jnp.bfloat16, out_dtype=None,
                        batch_tile=None):
    """x: (B, input_size). params: 8 (w, b) pairs, w: (in, out), b: (1, out), f32.

    io_dtype: dtype of HBM<->VMEM traffic for x / output / weights (default
              bf16 on all generations -- this kernel is HBM-bound).  MXU
              accumulation is always f32.
    NOTE: the returned array's dtype is `out_dtype` (defaults to io_dtype, i.e.
          bf16 by default); pass out_dtype=jnp.float32 if f32 output is needed.
    """
    B, D = x.shape
    if out_dtype is None:
        out_dtype = io_dtype
    D_pad = ((D + 127) // 128) * 128      # lane-dense padding of the I/O dim

    (w1, b1), (w2, b2), (w3, b3), (w4, b4), \
        (w5, b5), (w6, b6), (w7, b7), (w8, b8) = params

    # Fold Linear(12,3) -> Linear(3,12): no activation in between, so the
    # composition is one exact 12->12 affine map (up to float reassociation).
    w45 = w4 @ w5
    b45 = b4 @ w5 + b5

    # Zero-pad the D dimension so the output block is lane-dense.
    pad = D_pad - D
    w1p = jnp.pad(w1, ((0, pad), (0, 0)))
    w8p = jnp.pad(w8, ((0, 0), (0, pad)))
    b8p = jnp.pad(b8, ((0, 0), (0, pad)))
    x_p = jnp.pad(x, ((0, 0), (0, pad))).astype(io_dtype)

    weights = [w.astype(io_dtype) for w in (w1p, w2, w3, w45, w6, w7, w8p)]
    biases = [b.astype(jnp.float32) for b in (b1, b2, b3, b45, b6, b7, b8p)]

    vmem_cap, num_tc, has_bf16_vpu = _tpu_info()
    io_itemsize = jnp.dtype(io_dtype).itemsize
    out_itemsize = jnp.dtype(out_dtype).itemsize
    param_bytes = sum(int(a.size) * a.dtype.itemsize for a in weights + biases)

    if batch_tile is None:
        batch_tile = _pick_batch_tile(B, D_pad, io_itemsize, out_itemsize,
                                      param_bytes, vmem_cap, num_tc)
    assert B % batch_tile == 0, "ragged batches unsupported (B % batch_tile != 0)"

    vmem_limit = _vmem_limit_bytes(batch_tile, D_pad, io_itemsize, out_itemsize,
                                   param_bytes, vmem_cap)

    # Elementwise chain dtype: bf16 where the VPU natively supports it.
    compute_dtype = (jnp.bfloat16
                     if (jnp.dtype(io_dtype) == jnp.dtype(jnp.bfloat16)
                         and has_bf16_vpu)
                     else jnp.float32)

    # Advisory cost estimate so XLA can overlap surrounding HLO.
    flops = 2 * B * (D_pad * 128 + 128 * 32 + 32 * 12 + 12 * 12 + 12 * 32
                     + 32 * 128 + 128 * D_pad)
    cost = pl.CostEstimate(
        flops=int(flops),
        transcendentals=int(B * D_pad),
        bytes_accessed=int(B * D_pad * (io_itemsize + out_itemsize) + param_bytes),
    )

    x_spec = pl.BlockSpec((batch_tile, D_pad), lambda i: (i, 0))
    out_spec = pl.BlockSpec((batch_tile, D_pad), lambda i: (i, 0))
    # Grid-invariant operands: full-extent block, constant index map (the
    # pipeliner DMAs them once; ~80-165 KB total, no special buffering needed).
    const_specs = [pl.BlockSpec(a.shape, lambda i: (0, 0))
                   for a in weights + biases]

    out = pl.pallas_call(
        functools.partial(_ae_kernel, compute_dtype=compute_dtype),
        out_shape=jax.ShapeDtypeStruct((B, D_pad), out_dtype),
        grid_spec=pltpu.PrefetchScalarGridSpec(
            num_scalar_prefetch=0,
            grid=(B // batch_tile,),
            in_specs=[x_spec] + const_specs,
            out_specs=out_spec,
        ),
        compiler_params=pltpu.CompilerParams(
            dimension_semantics=("parallel",),
            vmem_limit_bytes=vmem_limit,
        ),
        cost_estimate=cost,
    )(x_p, *weights, *biases)

    return out[:, :D]


# -----------------------------------------------------------------------------
# Init + pure-JAX reference (unfolded 8-layer forward).
# -----------------------------------------------------------------------------
def init_params(key, input_size):
    """Deterministic init mimicking PyTorch nn.Linear (U(-1/sqrt(fan_in), ...))."""
    dims = [input_size, 128, 32, 12, 3, 12, 32, 128, input_size]
    params = []
    for i in range(len(dims) - 1):
        fan_in, fan_out = dims[i], dims[i + 1]
        key, kw, kb = jax.random.split(key, 3)
        bound = 1.0 / jnp.sqrt(float(fan_in))
        w = jax.random.uniform(kw, (fan_in, fan_out), jnp.float32, -bound, bound)
        b = jax.random.uniform(kb, (1, fan_out), jnp.float32, -bound, bound)
        params.append((w, b))
    return params


def reference_forward(x, params):
    h = x
    for i, (w, b) in enumerate(params):
        h = h @ w + b
        if i < 3 or (3 < i < 7):      # ReLU after layers 0,1,2 and 4,5,6
            h = jnp.maximum(h, 0.0)
    return jnp.tanh(h)                # final Tanh


if __name__ == "__main__":
    input_size = 96    # deliberately NOT a multiple of 128 -> exercises lane padding
    batch = 64

    key = jax.random.PRNGKey(0)
    key, kx = jax.random.split(key)
    x = jax.random.normal(kx, (batch, input_size), jnp.float32)
    params = init_params(jax.random.PRNGKey(0), input_size)

    ref = reference_forward(x, params)

    # f32 I/O path: exact up to float reassociation of the 12->3->12 fold.
    out_f32 = jax.block_until_ready(
        autoencoder_forward(x, params, io_dtype=jnp.float32))
    assert out_f32.shape == (batch, input_size)
    assert jnp.allclose(out_f32, ref, atol=1e-4, rtol=1e-4), "f32 mismatch vs reference"

    # Default path: bf16 HBM I/O (bandwidth-optimal on all generations), f32 accumulation.
    out_bf16 = jax.block_until_ready(autoencoder_forward(x, params))
    assert out_bf16.shape == (batch, input_size)
    assert out_bf16.dtype == jnp.bfloat16
    assert jnp.allclose(out_bf16.astype(jnp.float32), ref, atol=5e-2, rtol=5e-2), \
        "bf16 mismatch vs reference"

    print("KERNEL_OK")
</pallas_src>

<mosaic_0001>
module attributes {stable_mosaic.version = 11 : i64} {
  func.func @_ae_kernel(%arg0: i32, %arg1: memref<64x128xf32, #tpu.memory_space<vmem>>, %arg2: memref<128x128xf32, #tpu.memory_space<vmem>>, %arg3: memref<128x32xf32, #tpu.memory_space<vmem>>, %arg4: memref<32x12xf32, #tpu.memory_space<vmem>>, %arg5: memref<12x12xf32, #tpu.memory_space<vmem>>, %arg6: memref<12x32xf32, #tpu.memory_space<vmem>>, %arg7: memref<32x128xf32, #tpu.memory_space<vmem>>, %arg8: memref<128x128xf32, #tpu.memory_space<vmem>>, %arg9: memref<1x128xf32, #tpu.memory_space<vmem>>, %arg10: memref<1x32xf32, #tpu.memory_space<vmem>>, %arg11: memref<1x12xf32, #tpu.memory_space<vmem>>, %arg12: memref<1x12xf32, #tpu.memory_space<vmem>>, %arg13: memref<1x32xf32, #tpu.memory_space<vmem>>, %arg14: memref<1x128xf32, #tpu.memory_space<vmem>>, %arg15: memref<1x128xf32, #tpu.memory_space<vmem>>, %arg16: memref<64x128xf32, #tpu.memory_space<vmem>>) attributes {dimension_semantics = [#tpu.dimension_semantics<parallel>], iteration_bounds = array<i64: 1>, scalar_prefetch = 0 : i64, scratch_operands = 0 : i64, tpu.core_type = #tpu.core_type<tc>, window_params = [{transform_indices = @transform_0, window_bounds = array<i64: 64, 128>}, {pipeline_mode = #tpu.pipeline_mode<synchronous>, transform_indices = @transform_1, window_bounds = array<i64: 128, 128>}, {pipeline_mode = #tpu.pipeline_mode<synchronous>, transform_indices = @transform_2, window_bounds = array<i64: 128, 32>}, {pipeline_mode = #tpu.pipeline_mode<synchronous>, transform_indices = @transform_3, window_bounds = array<i64: 32, 12>}, {pipeline_mode = #tpu.pipeline_mode<synchronous>, transform_indices = @transform_4, window_bounds = array<i64: 12, 12>}, {pipeline_mode = #tpu.pipeline_mode<synchronous>, transform_indices = @transform_5, window_bounds = array<i64: 12, 32>}, {pipeline_mode = #tpu.pipeline_mode<synchronous>, transform_indices = @transform_6, window_bounds = array<i64: 32, 128>}, {pipeline_mode = #tpu.pipeline_mode<synchronous>, transform_indices = @transform_7, window_bounds = array<i64: 128, 128>}, {pipeline_mode = #tpu.pipeline_mode<synchronous>, transform_indices = @transform_8, window_bounds = array<i64: 1, 128>}, {pipeline_mode = #tpu.pipeline_mode<synchronous>, transform_indices = @transform_9, window_bounds = array<i64: 1, 32>}, {pipeline_mode = #tpu.pipeline_mode<synchronous>, transform_indices = @transform_10, window_bounds = array<i64: 1, 12>}, {pipeline_mode = #tpu.pipeline_mode<synchronous>, transform_indices = @transform_11, window_bounds = array<i64: 1, 12>}, {pipeline_mode = #tpu.pipeline_mode<synchronous>, transform_indices = @transform_12, window_bounds = array<i64: 1, 32>}, {pipeline_mode = #tpu.pipeline_mode<synchronous>, transform_indices = @transform_13, window_bounds = array<i64: 1, 128>}, {pipeline_mode = #tpu.pipeline_mode<synchronous>, transform_indices = @transform_14, window_bounds = array<i64: 1, 128>}, {transform_indices = @transform_15, window_bounds = array<i64: 64, 128>}]} {
    %c0 = arith.constant 0 : index
    %c0_0 = arith.constant 0 : index
    %0 = vector.load %arg1[%c0, %c0_0] : memref<64x128xf32, #tpu.memory_space<vmem>>, vector<64x128xf32>
    %c0_1 = arith.constant 0 : index
    %c0_2 = arith.constant 0 : index
    %1 = vector.load %arg2[%c0_1, %c0_2] : memref<128x128xf32, #tpu.memory_space<vmem>>, vector<128x128xf32>
    %cst = arith.constant dense<0.000000e+00> : vector<64x128xf32>
    %2 = tpu.matmul %0, %1, %cst {dimension_numbers = #tpu.dot_dimension_numbers<[1], [0], [0], [1], [0, 0, 1, 1], [], []>} : vector<64x128xf32>, vector<128x128xf32>, vector<64x128xf32> -> vector<64x128xf32>
    %c0_3 = arith.constant 0 : index
    %c0_4 = arith.constant 0 : index
    %3 = vector.load %arg9[%c0_3, %c0_4] : memref<1x128xf32, #tpu.memory_space<vmem>>, vector<1x128xf32>
    %4 = vector.broadcast %3 : vector<1x128xf32> to vector<64x128xf32>
    %5 = arith.addf %2, %4 : vector<64x128xf32>
    %cst_5 = arith.constant 0.000000e+00 : f32
    %6 = vector.broadcast %cst_5 : f32 to vector<64x128xf32>
    %7 = arith.maximumf %5, %6 : vector<64x128xf32>
    %c0_6 = arith.constant 0 : index
    %c0_7 = arith.constant 0 : index
    %8 = vector.load %arg3[%c0_6, %c0_7] : memref<128x32xf32, #tpu.memory_space<vmem>>, vector<128x32xf32>
    %cst_8 = arith.constant dense<0.000000e+00> : vector<64x32xf32>
    %9 = tpu.matmul %7, %8, %cst_8 {dimension_numbers = #tpu.dot_dimension_numbers<[1], [0], [0], [1], [0, 0, 1, 1], [], []>} : vector<64x128xf32>, vector<128x32xf32>, vector<64x32xf32> -> vector<64x32xf32>
    %c0_9 = arith.constant 0 : index
    %c0_10 = arith.constant 0 : index
    %10 = vector.load %arg10[%c0_9, %c0_10] : memref<1x32xf32, #tpu.memory_space<vmem>>, vector<1x32xf32>
    %11 = vector.broadcast %10 : vector<1x32xf32> to vector<64x32xf32>
    %12 = arith.addf %9, %11 : vector<64x32xf32>
    %cst_11 = arith.constant 0.000000e+00 : f32
    %13 = vector.broadcast %cst_11 : f32 to vector<64x32xf32>
    %14 = arith.maximumf %12, %13 : vector<64x32xf32>
    %c0_12 = arith.constant 0 : index
    %c0_13 = arith.constant 0 : index
    %15 = vector.load %arg4[%c0_12, %c0_13] : memref<32x12xf32, #tpu.memory_space<vmem>>, vector<32x12xf32>
    %cst_14 = arith.constant dense<0.000000e+00> : vector<64x12xf32>
    %16 = tpu.matmul %14, %15, %cst_14 {dimension_numbers = #tpu.dot_dimension_numbers<[1], [0], [0], [1], [0, 0, 1, 1], [], []>} : vector<64x32xf32>, vector<32x12xf32>, vector<64x12xf32> -> vector<64x12xf32>
    %c0_15 = arith.constant 0 : index
    %c0_16 = arith.constant 0 : index
    %17 = vector.load %arg11[%c0_15, %c0_16] : memref<1x12xf32, #tpu.memory_space<vmem>>, vector<1x12xf32>
    %18 = vector.broadcast %17 : vector<1x12xf32> to vector<64x12xf32>
    %19 = arith.addf %16, %18 : vector<64x12xf32>
    %cst_17 = arith.constant 0.000000e+00 : f32
    %20 = vector.broadcast %cst_17 : f32 to vector<64x12xf32>
    %21 = arith.maximumf %19, %20 : vector<64x12xf32>
    %c0_18 = arith.constant 0 : index
    %c0_19 = arith.constant 0 : index
    %22 = vector.load %arg5[%c0_18, %c0_19] : memref<12x12xf32, #tpu.memory_space<vmem>>, vector<12x12xf32>
    %cst_20 = arith.constant dense<0.000000e+00> : vector<64x12xf32>
    %23 = tpu.matmul %21, %22, %cst_20 {dimension_numbers = #tpu.dot_dimension_numbers<[1], [0], [0], [1], [0, 0, 1, 1], [], []>} : vector<64x12xf32>, vector<12x12xf32>, vector<64x12xf32> -> vector<64x12xf32>
    %c0_21 = arith.constant 0 : index
    %c0_22 = arith.constant 0 : index
    %24 = vector.load %arg12[%c0_21, %c0_22] : memref<1x12xf32, #tpu.memory_space<vmem>>, vector<1x12xf32>
    %25 = vector.broadcast %24 : vector<1x12xf32> to vector<64x12xf32>
    %26 = arith.addf %23, %25 : vector<64x12xf32>
    %cst_23 = arith.constant 0.000000e+00 : f32
    %27 = vector.broadcast %cst_23 : f32 to vector<64x12xf32>
    %28 = arith.maximumf %26, %27 : vector<64x12xf32>
    %c0_24 = arith.constant 0 : index
    %c0_25 = arith.constant 0 : index
    %29 = vector.load %arg6[%c0_24, %c0_25] : memref<12x32xf32, #tpu.memory_space<vmem>>, vector<12x32xf32>
    %cst_26 = arith.constant dense<0.000000e+00> : vector<64x32xf32>
    %30 = tpu.matmul %28, %29, %cst_26 {dimension_numbers = #tpu.dot_dimension_numbers<[1], [0], [0], [1], [0, 0, 1, 1], [], []>} : vector<64x12xf32>, vector<12x32xf32>, vector<64x32xf32> -> vector<64x32xf32>
    %c0_27 = arith.constant 0 : index
    %c0_28 = arith.constant 0 : index
    %31 = vector.load %arg13[%c0_27, %c0_28] : memref<1x32xf32, #tpu.memory_space<vmem>>, vector<1x32xf32>
    %32 = vector.broadcast %31 : vector<1x32xf32> to vector<64x32xf32>
    %33 = arith.addf %30, %32 : vector<64x32xf32>
    %cst_29 = arith.constant 0.000000e+00 : f32
    %34 = vector.broadcast %cst_29 : f32 to vector<64x32xf32>
    %35 = arith.maximumf %33, %34 : vector<64x32xf32>
    %c0_30 = arith.constant 0 : index
    %c0_31 = arith.constant 0 : index
    %36 = vector.load %arg7[%c0_30, %c0_31] : memref<32x128xf32, #tpu.memory_space<vmem>>, vector<32x128xf32>
    %cst_32 = arith.constant dense<0.000000e+00> : vector<64x128xf32>
    %37 = tpu.matmul %35, %36, %cst_32 {dimension_numbers = #tpu.dot_dimension_numbers<[1], [0], [0], [1], [0, 0, 1, 1], [], []>} : vector<64x32xf32>, vector<32x128xf32>, vector<64x128xf32> -> vector<64x128xf32>
    %c0_33 = arith.constant 0 : index
    %c0_34 = arith.constant 0 : index
    %38 = vector.load %arg14[%c0_33, %c0_34] : memref<1x128xf32, #tpu.memory_space<vmem>>, vector<1x128xf32>
    %39 = vector.broadcast %38 : vector<1x128xf32> to vector<64x128xf32>
    %40 = arith.addf %37, %39 : vector<64x128xf32>
    %cst_35 = arith.constant 0.000000e+00 : f32
    %41 = vector.broadcast %cst_35 : f32 to vector<64x128xf32>
    %42 = arith.maximumf %40, %41 : vector<64x128xf32>
    %c0_36 = arith.constant 0 : index
    %c0_37 = arith.constant 0 : index
    %43 = vector.load %arg8[%c0_36, %c0_37] : memref<128x128xf32, #tpu.memory_space<vmem>>, vector<128x128xf32>
    %cst_38 = arith.constant dense<0.000000e+00> : vector<64x128xf32>
    %44 = tpu.matmul %42, %43, %cst_38 {dimension_numbers = #tpu.dot_dimension_numbers<[1], [0], [0], [1], [0, 0, 1, 1], [], []>} : vector<64x128xf32>, vector<128x128xf32>, vector<64x128xf32> -> vector<64x128xf32>
    %c0_39 = arith.constant 0 : index
    %c0_40 = arith.constant 0 : index
    %45 = vector.load %arg15[%c0_39, %c0_40] : memref<1x128xf32, #tpu.memory_space<vmem>>, vector<1x128xf32>
    %46 = vector.broadcast %45 : vector<1x128xf32> to vector<64x128xf32>
    %47 = arith.addf %44, %46 : vector<64x128xf32>
    %48 = math.tanh %47 : vector<64x128xf32>
    %c0_41 = arith.constant 0 : index
    %c0_42 = arith.constant 0 : index
    %49 = vector.load %arg16[%c0_41, %c0_42] : memref<64x128xf32, #tpu.memory_space<vmem>>, vector<64x128xf32>
    tpu.vector_store %arg16[%c0_41, %c0_42], %48 {strides = array<i32>} : memref<64x128xf32, #tpu.memory_space<vmem>>, vector<64x128xf32>,
    return
  }
  func.func @transform_0(%arg0: i32) -> (i32, i32) {
    %c0_i32 = arith.constant 0 : i32
    %c0_i32_0 = arith.constant 0 : i32
    return %arg0, %c0_i32 : i32, i32
  }
  func.func @transform_1(%arg0: i32) -> (i32, i32) {
    %c0_i32 = arith.constant 0 : i32
    %c0_i32_0 = arith.constant 0 : i32
    %c0_i32_1 = arith.constant 0 : i32
    return %c0_i32, %c0_i32_0 : i32, i32
  }
  func.func @transform_2(%arg0: i32) -> (i32, i32) {
    %c0_i32 = arith.constant 0 : i32
    %c0_i32_0 = arith.constant 0 : i32
    %c0_i32_1 = arith.constant 0 : i32
    return %c0_i32, %c0_i32_0 : i32, i32
  }
  func.func @transform_3(%arg0: i32) -> (i32, i32) {
    %c0_i32 = arith.constant 0 : i32
    %c0_i32_0 = arith.constant 0 : i32
    %c0_i32_1 = arith.constant 0 : i32
    return %c0_i32, %c0_i32_0 : i32, i32
  }
  func.func @transform_4(%arg0: i32) -> (i32, i32) {
    %c0_i32 = arith.constant 0 : i32
    %c0_i32_0 = arith.constant 0 : i32
    %c0_i32_1 = arith.constant 0 : i32
    return %c0_i32, %c0_i32_0 : i32, i32
  }
  func.func @transform_5(%arg0: i32) -> (i32, i32) {
    %c0_i32 = arith.constant 0 : i32
    %c0_i32_0 = arith.constant 0 : i32
    %c0_i32_1 = arith.constant 0 : i32
    return %c0_i32, %c0_i32_0 : i32, i32
  }
  func.func @transform_6(%arg0: i32) -> (i32, i32) {
    %c0_i32 = arith.constant 0 : i32
    %c0_i32_0 = arith.constant 0 : i32
    %c0_i32_1 = arith.constant 0 : i32
    return %c0_i32, %c0_i32_0 : i32, i32
  }
  func.func @transform_7(%arg0: i32) -> (i32, i32) {
    %c0_i32 = arith.constant 0 : i32
    %c0_i32_0 = arith.constant 0 : i32
    %c0_i32_1 = arith.constant 0 : i32
    return %c0_i32, %c0_i32_0 : i32, i32
  }
  func.func @transform_8(%arg0: i32) -> (i32, i32) {
    %c0_i32 = arith.constant 0 : i32
    %c0_i32_0 = arith.constant 0 : i32
    %c0_i32_1 = arith.constant 0 : i32
    return %c0_i32, %c0_i32_0 : i32, i32
  }
  func.func @transform_9(%arg0: i32) -> (i32, i32) {
    %c0_i32 = arith.constant 0 : i32
    %c0_i32_0 = arith.constant 0 : i32
    %c0_i32_1 = arith.constant 0 : i32
    return %c0_i32, %c0_i32_0 : i32, i32
  }
  func.func @transform_10(%arg0: i32) -> (i32, i32) {
    %c0_i32 = arith.constant 0 : i32
    %c0_i32_0 = arith.constant 0 : i32
    %c0_i32_1 = arith.constant 0 : i32
    return %c0_i32, %c0_i32_0 : i32, i32
  }
  func.func @transform_11(%arg0: i32) -> (i32, i32) {
    %c0_i32 = arith.constant 0 : i32
    %c0_i32_0 = arith.constant 0 : i32
    %c0_i32_1 = arith.constant 0 : i32
    return %c0_i32, %c0_i32_0 : i32, i32
  }
  func.func @transform_12(%arg0: i32) -> (i32, i32) {
    %c0_i32 = arith.constant 0 : i32
    %c0_i32_0 = arith.constant 0 : i32
    %c0_i32_1 = arith.constant 0 : i32
    return %c0_i32, %c0_i32_0 : i32, i32
  }
  func.func @transform_13(%arg0: i32) -> (i32, i32) {
    %c0_i32 = arith.constant 0 : i32
    %c0_i32_0 = arith.constant 0 : i32
    %c0_i32_1 = arith.constant 0 : i32
    return %c0_i32, %c0_i32_0 : i32, i32
  }
  func.func @transform_14(%arg0: i32) -> (i32, i32) {
    %c0_i32 = arith.constant 0 : i32
    %c0_i32_0 = arith.constant 0 : i32
    %c0_i32_1 = arith.constant 0 : i32
    return %c0_i32, %c0_i32_0 : i32, i32
  }
  func.func @transform_15(%arg0: i32) -> (i32, i32) {
    %c0_i32 = arith.constant 0 : i32
    %c0_i32_0 = arith.constant 0 : i32
    return %arg0, %c0_i32 : i32, i32
  }
}

</mosaic_0001>

<llo_original>
// kernel: tpu_custom_call.1
$region0: #{tpu_custom_call.1}
  #allocation0 [shape = 'u32[]', space=smem, size = 0x4, offset = 0x4, fixed_abs, tag = 'smem constant byte address 0x4 - core index']
  #allocation1 [shape = 'u32[144,128]{1,0:T(1,128)}', space=vmem, size = 0x12000, scoped, tag = 'internal scratch']
  %s0 = inlined_call_operand.vmem [shape: f32[64,128], index: 0, kind: input, shape index: {}]
  %s1 = inlined_call_operand.vmem [shape: f32[128,128], index: 1, kind: input, shape index: {}]
  %s2 = inlined_call_operand.vmem [shape: f32[128,32], index: 2, kind: input, shape index: {}]
  %s3 = inlined_call_operand.vmem [shape: f32[32,12], index: 3, kind: input, shape index: {}]
  %s4 = inlined_call_operand.hbm [shape: f32[12,12], index: 4, kind: input, shape index: {}]
  %s5 = inlined_call_operand.hbm [shape: f32[12,32], index: 5, kind: input, shape index: {}]
  %s6 = inlined_call_operand.vmem [shape: f32[32,128], index: 6, kind: input, shape index: {}]
  %s7 = inlined_call_operand.hbm [shape: f32[128,128], index: 7, kind: input, shape index: {}]
  %s8 = inlined_call_operand.vmem [shape: f32[1,128], index: 8, kind: input, shape index: {}]
  %s9 = inlined_call_operand.vmem [shape: f32[1,32], index: 9, kind: input, shape index: {}]
  %s10 = inlined_call_operand.vmem [shape: f32[1,12], index: 10, kind: input, shape index: {}]
  %s11 = inlined_call_operand.vmem [shape: f32[1,12], index: 11, kind: input, shape index: {}]
  %s12 = inlined_call_operand.vmem [shape: f32[1,32], index: 12, kind: input, shape index: {}]
  %s13 = inlined_call_operand.vmem [shape: f32[1,128], index: 13, kind: input, shape index: {}]
  %s14 = inlined_call_operand.vmem [shape: f32[1,128], index: 14, kind: input, shape index: {}]
  %s15 = inlined_call_operand.hbm [shape: f32[64,128], index: 15, kind: output, shape index: {}]
  %s16 = sld [smem:[#allocation0]]
  $region82: #{tpu_custom_call.1} parent=0
    _
  %s18 = ssub.s32 1, %s16
  %s19 = scalar_select 0, %s18, %s16
  $region1: #{tpu_custom_call.1} parent=0
    #allocation2 [shape = 'u8[8192]{0}', space=vmem, size = 0x2000, scoped, tag = 'input window, operand 4, single buffered']
    #allocation3 [shape = 's32[1]{0}', space=sflag, size = 0x4, scoped, tag = 'scoped memory for tpu_custom_call.1']
    #allocation4 [shape = 's32[1]{0}', space=sflag, size = 0x4, scoped, tag = 'scoped memory for tpu_custom_call.1']
    #allocation5 [shape = 'u8[8192]{0}', space=vmem, size = 0x2000, scoped, tag = 'input window, operand 5, single buffered']
    #allocation6 [shape = 's32[1]{0}', space=sflag, size = 0x4, scoped, tag = 'scoped memory for tpu_custom_call.1']
    #allocation7 [shape = 'u8[65536]{0}', space=vmem, size = 0x10000, scoped, tag = 'input window, operand 7, single buffered']
    #allocation8 [shape = 'u8[32768]{0}', space=vmem, size = 0x8000, scoped, tag = 'output window, operand 0, single buffered']
    %20 = vsyncpa [#allocation3], 0
    %21 = vsyncpa [#allocation6], 0
    %22 = vsyncpa [#allocation4], 0
    // Predicated region
    $region2: #{tpu_custom_call.1} parent=1 // pred_check
      _
    $region3: #{tpu_custom_call.1} parent=1 // pred_check_branch
      %24 = sbr.rel (0) target = $region5
    $region4: #{tpu_custom_call.1} parent=1 // pred_region
      _
    $region5: #{tpu_custom_call.1} parent=1 // pred_fallthru
      _
    // Predicated region
    $region6: #{tpu_custom_call.1} parent=1 // pred_check
      _
    $region7: #{tpu_custom_call.1} parent=1 // pred_check_branch
      %26 = sbr.rel (0) target = $region9
    $region8: #{tpu_custom_call.1} parent=1 // pred_region
      _
    $region9: #{tpu_custom_call.1} parent=1 // pred_fallthru
      _
    // Predicated region
    $region10: #{tpu_custom_call.1} parent=1 // pred_check
      _
    $region11: #{tpu_custom_call.1} parent=1 // pred_check_branch
      %28 = sbr.rel (0) target = $region13
    $region12: #{tpu_custom_call.1} parent=1 // pred_region
      _
    $region13: #{tpu_custom_call.1} parent=1 // pred_fallthru
      _
    // Predicated region
    $region14: #{tpu_custom_call.1} parent=1 // pred_check
      _
    $region15: #{tpu_custom_call.1} parent=1 // pred_check_branch
      %30 = sbr.rel (0) target = $region17
    $region16: #{tpu_custom_call.1} parent=1 // pred_region
      _
    $region17: #{tpu_custom_call.1} parent=1 // pred_fallthru
      _
    // Predicated region
    $region18: #{tpu_custom_call.1} parent=1 // pred_check
      _
    $region19: #{tpu_custom_call.1} parent=1 // pred_check_branch
      %32 = sbr.rel (0) target = $region21
    $region20: #{tpu_custom_call.1} parent=1 // pred_region
      %s34 = ssub.s32 256, 256
      %35 = vsyncadd [#allocation3], %s34
      %s36 = sshll.u32 [#allocation2], 4
      %s37 = int_to_ptr.vmem [resolvable:$true] %s36
      %42 = dma.hbm_to_vmem [thread:$0]  %s4, 256, %s37, [#allocation3], 128, 128, 8
    $region21: #{tpu_custom_call.1} parent=1 // pred_fallthru
      _
    // Predicated region
    $region22: #{tpu_custom_call.1} parent=1 // pred_check
      _
    $region23: #{tpu_custom_call.1} parent=1 // pred_check_branch
      %44 = sbr.rel (0) target = $region25
    $region24: #{tpu_custom_call.1} parent=1 // pred_region
      %s46 = ssub.s32 256, 256
      %47 = vsyncadd [#allocation6], %s46
      %s48 = sshll.u32 [#allocation5], 4
      %s49 = int_to_ptr.vmem [resolvable:$true] %s48
      %54 = dma.hbm_to_vmem [thread:$0]  %s5, 256, %s49, [#allocation6], 128, 128, 8
    $region25: #{tpu_custom_call.1} parent=1 // pred_fallthru
      _
    // Predicated region
    $region26: #{tpu_custom_call.1} parent=1 // pred_check
      _
    $region27: #{tpu_custom_call.1} parent=1 // pred_check_branch
      %56 = sbr.rel (0) target = $region29
    $region28: #{tpu_custom_call.1} parent=1 // pred_region
      _
    $region29: #{tpu_custom_call.1} parent=1 // pred_fallthru
      _
    // Predicated region
    $region30: #{tpu_custom_call.1} parent=1 // pred_check
      _
    $region31: #{tpu_custom_call.1} parent=1 // pred_check_branch
      %58 = sbr.rel (0) target = $region33
    $region32: #{tpu_custom_call.1} parent=1 // pred_region
      %s60 = ssub.s32 2048, 2048
      %61 = vsyncadd [#allocation6], %s60
      %s62 = sshll.u32 [#allocation7], 4
      %s63 = int_to_ptr.vmem [resolvable:$true] %s62
      %68 = dma.hbm_to_vmem [thread:$0]  %s7, 2048, %s63, [#allocation6], 128, 128, 8
    $region33: #{tpu_custom_call.1} parent=1 // pred_fallthru
      _
    // Predicated region
    $region34: #{tpu_custom_call.1} parent=1 // pred_check
      _
    $region35: #{tpu_custom_call.1} parent=1 // pred_check_branch
      %70 = sbr.rel (0) target = $region37
    $region36: #{tpu_custom_call.1} parent=1 // pred_region
      _
    $region37: #{tpu_custom_call.1} parent=1 // pred_fallthru
      _
    // Predicated region
    $region38: #{tpu_custom_call.1} parent=1 // pred_check
      _
    $region39: #{tpu_custom_call.1} parent=1 // pred_check_branch
      %72 = sbr.rel (0) target = $region41
    $region40: #{tpu_custom_call.1} parent=1 // pred_region
      _
    $region41: #{tpu_custom_call.1} parent=1 // pred_fallthru
      _
    // Predicated region
    $region42: #{tpu_custom_call.1} parent=1 // pred_check
      _
    $region43: #{tpu_custom_call.1} parent=1 // pred_check_branch
      %74 = sbr.rel (0) target = $region45
    $region44: #{tpu_custom_call.1} parent=1 // pred_region
      _
    $region45: #{tpu_custom_call.1} parent=1 // pred_fallthru
      _
    // Predicated region
    $region46: #{tpu_custom_call.1} parent=1 // pred_check
      _
    $region47: #{tpu_custom_call.1} parent=1 // pred_check_branch
      %76 = sbr.rel (0) target = $region49
    $region48: #{tpu_custom_call.1} parent=1 // pred_region
      _
    $region49: #{tpu_custom_call.1} parent=1 // pred_fallthru
      _
    // Predicated region
    $region50: #{tpu_custom_call.1} parent=1 // pred_check
      _
    $region51: #{tpu_custom_call.1} parent=1 // pred_check_branch
      %78 = sbr.rel (0) target = $region53
    $region52: #{tpu_custom_call.1} parent=1 // pred_region
      _
    $region53: #{tpu_custom_call.1} parent=1 // pred_fallthru
      _
    // Predicated region
    $region54: #{tpu_custom_call.1} parent=1 // pred_check
      _
    $region55: #{tpu_custom_call.1} parent=1 // pred_check_branch
      %80 = sbr.rel (0) target = $region57
    $region56: #{tpu_custom_call.1} parent=1 // pred_region
      _
    $region57: #{tpu_custom_call.1} parent=1 // pred_fallthru
      _
    // Predicated region
    $region58: #{tpu_custom_call.1} parent=1 // pred_check
      _
    $region59: #{tpu_custom_call.1} parent=1 // pred_check_branch
      %82 = sbr.rel (0) target = $region61
    $region60: #{tpu_custom_call.1} parent=1 // pred_region
      _
    $region61: #{tpu_custom_call.1} parent=1 // pred_fallthru
      _
    // Predicated region
    $region62: #{tpu_custom_call.1} parent=1 // pred_check
      _
    $region63: #{tpu_custom_call.1} parent=1 // pred_check_branch
      %84 = sbr.rel (0) target = $region65
    $region64: #{tpu_custom_call.1} parent=1 // pred_region
      %85 = dma.done [#allocation3], 256
    $region65: #{tpu_custom_call.1} parent=1 // pred_fallthru
      _
    // Predicated region
    $region66: #{tpu_custom_call.1} parent=1 // pred_check
      _
    $region67: #{tpu_custom_call.1} parent=1 // pred_check_branch
      %87 = sbr.rel (0) target = $region69
    $region68: #{tpu_custom_call.1} parent=1 // pred_region
      %88 = dma.done [#allocation6], 256
    $region69: #{tpu_custom_call.1} parent=1 // pred_fallthru
      _
    // Predicated region
    $region70: #{tpu_custom_call.1} parent=1 // pred_check
      _
    $region71: #{tpu_custom_call.1} parent=1 // pred_check_branch
      %90 = sbr.rel (0) target = $region73
    $region72: #{tpu_custom_call.1} parent=1 // pred_region
      %91 = dma.done [#allocation6], 2048
    $region73: #{tpu_custom_call.1} parent=1 // pred_fallthru
      _
    %v92 = vld [vmem:[%s0] sm:$0xff]
    %v93 = vld [vmem:[%s0 + $0x8] sm:$0xff]
    %v94 = vld [vmem:[%s0 + $0x10] sm:$0xff]
    %v95 = vld [vmem:[%s0 + $0x18] sm:$0xff]
    %v96 = vld [vmem:[%s0 + $0x20] sm:$0xff]
    %v97 = vld [vmem:[%s0 + $0x28] sm:$0xff]
    %v98 = vld [vmem:[%s0 + $0x30] sm:$0xff]
    %v99 = vld [vmem:[%s0 + $0x38] sm:$0xff]
    %v100 = vld [vmem:[%s1] sm:$0xff]
    %v101 = vld [vmem:[%s1 + $0x8] sm:$0xff]
    %v102 = vld [vmem:[%s1 + $0x10] sm:$0xff]
    %v103 = vld [vmem:[%s1 + $0x18] sm:$0xff]
    %v104 = vld [vmem:[%s1 + $0x20] sm:$0xff]
    %v105 = vld [vmem:[%s1 + $0x28] sm:$0xff]
    %v106 = vld [vmem:[%s1 + $0x30] sm:$0xff]
    %v107 = vld [vmem:[%s1 + $0x38] sm:$0xff]
    %v108 = vld [vmem:[%s1 + $0x40] sm:$0xff]
    %v109 = vld [vmem:[%s1 + $0x48] sm:$0xff]
    %v110 = vld [vmem:[%s1 + $0x50] sm:$0xff]
    %v111 = vld [vmem:[%s1 + $0x58] sm:$0xff]
    %v112 = vld [vmem:[%s1 + $0x60] sm:$0xff]
    %v113 = vld [vmem:[%s1 + $0x68] sm:$0xff]
    %v114 = vld [vmem:[%s1 + $0x70] sm:$0xff]
    %v115 = vld [vmem:[%s1 + $0x78] sm:$0xff]
    %v116 = vld [vmem:[%s8] sm:$0x1]
    %v118 = vlaneseq
    %v119 = vshrl.u32 %v118, 7
    %v120 = vsub.s32 0, %v119
    %v121 = vrot.slane %v116, %v120
    %123 = vmatprep.subr.mxu0 0.0
    %124 = vmatpush1.msra.mxu0 %v100
    %125 = vmatprep.subr.mxu0 0.0
    %126 = vmatpush1.msra.mxu0 %v101
    %127 = vmatprep.subr.mxu0 0.0
    %128 = vmatpush1.msra.mxu0 %v102
    %129 = vmatprep.subr.mxu0 0.0
    %130 = vmatpush1.msra.mxu0 %v103
    %131 = vmatprep.subr.mxu0 0.0
    %132 = vmatpush1.msra.mxu0 %v104
    %133 = vmatprep.subr.mxu0 0.0
    %134 = vmatpush1.msra.mxu0 %v105
    %135 = vmatprep.subr.mxu0 0.0
    %136 = vmatpush1.msra.mxu0 %v106
    %137 = vmatprep.subr.mxu0 0.0
    %138 = vmatpush1.msra.mxu0 %v107
    %139 = vmatprep.subr.mxu0 0.0
    %140 = vmatpush1.msra.mxu0 %v108
    %141 = vmatprep.subr.mxu0 0.0
    %142 = vmatpush1.msra.mxu0 %v109
    %143 = vmatprep.subr.mxu0 0.0
    %144 = vmatpush1.msra.mxu0 %v110
    %145 = vmatprep.subr.mxu0 0.0
    %146 = vmatpush1.msra.mxu0 %v111
    %147 = vmatprep.subr.mxu0 0.0
    %148 = vmatpush1.msra.mxu0 %v112
    %149 = vmatprep.subr.mxu0 0.0
    %150 = vmatpush1.msra.mxu0 %v113
    %151 = vmatprep.subr.mxu0 0.0
    %152 = vmatpush1.msra.mxu0 %v114
    %153 = vmatprep.subr.mxu0 0.0
    %154 = vmatpush1.msra.mxu0 %v115
    %155 = vmatprep.subr.mxu0 0.0
    %156 = vmatpush1.msra.mxu0 0.0
    %157 = vmatprep.subr.mxu0 0.0
    %158 = vmatpush1.msra.mxu0 0.0
    %159 = vmatprep.subr.mxu0 0.0
    %160 = vmatpush1.msra.mxu0 0.0
    %161 = vmatprep.subr.mxu0 0.0
    %162 = vmatpush1.msra.mxu0 0.0
    %163 = vmatprep.subr.mxu0 0.0
    %164 = vmatpush1.msra.mxu0 0.0
    %165 = vmatprep.subr.mxu0 0.0
    %166 = vmatpush1.msra.mxu0 0.0
    %167 = vmatprep.subr.mxu0 0.0
    %168 = vmatpush1.msra.mxu0 0.0
    %169 = vmatprep.subr.mxu0 0.0
    %170 = vmatpush1.msra.mxu0 0.0
    %171 = vmatprep.subr.mxu0 0.0
    %172 = vmatpush1.msra.mxu0 0.0
    %173 = vmatprep.subr.mxu0 0.0
    %174 = vmatpush1.msra.mxu0 0.0
    %175 = vmatprep.subr.mxu0 0.0
    %176 = vmatpush1.msra.mxu0 0.0
    %177 = vmatprep.subr.mxu0 0.0
    %178 = vmatpush1.msra.mxu0 0.0
    %179 = vmatprep.subr.mxu0 0.0
    %180 = vmatpush1.msra.mxu0 0.0
    %181 = vmatprep.subr.mxu0 0.0
    %182 = vmatpush1.msra.mxu0 0.0
    %183 = vmatprep.subr.mxu0 0.0
    %184 = vmatpush1.msra.mxu0 0.0
    %185 = vmatprep.subr.mxu0 0.0
    %186 = vmatpush1.msra.mxu0 0.0
    %187 = vmatprep.mubr.f32.mxu0 0.0
    %188 = vmatmul.mubr.f32.gmra.mrb[0].mxu0 %v92
    %v189 = vpop.f32.mrb[0].mxu0
    %v190 = vadd.f32 %v121, %v189
    %v191 = vpop.f32.mrb[0].mxu0
    %192 = vmatprep.mubr.f32.mxu0 0.0
    %193 = vmatmul.mubr.f32.gmra.mrb[0].mxu0 %v93
    %v194 = vpop.f32.mrb[0].mxu0
    %v195 = vadd.f32 %v121, %v194
    %v196 = vpop.f32.mrb[0].mxu0
    %197 = vmatprep.mubr.f32.mxu0 0.0
    %198 = vmatmul.mubr.f32.gmra.mrb[0].mxu0 %v94
    %v199 = vpop.f32.mrb[0].mxu0
    %v200 = vadd.f32 %v121, %v199
    %v201 = vpop.f32.mrb[0].mxu0
    %202 = vmatprep.mubr.f32.mxu0 0.0
    %203 = vmatmul.mubr.f32.gmra.mrb[0].mxu0 %v95
    %v204 = vpop.f32.mrb[0].mxu0
    %v205 = vadd.f32 %v121, %v204
    %v206 = vpop.f32.mrb[0].mxu0
    %207 = vmatprep.mubr.f32.mxu0 0.0
    %208 = vmatmul.mubr.f32.gmra.mrb[0].mxu0 %v96
    %v209 = vpop.f32.mrb[0].mxu0
    %v210 = vadd.f32 %v121, %v209
    %v211 = vpop.f32.mrb[0].mxu0
    %212 = vmatprep.mubr.f32.mxu0 0.0
    %213 = vmatmul.mubr.f32.gmra.mrb[0].mxu0 %v97
    %v214 = vpop.f32.mrb[0].mxu0
    %v215 = vadd.f32 %v121, %v214
    %v216 = vpop.f32.mrb[0].mxu0
    %217 = vmatprep.mubr.f32.mxu0 0.0
    %218 = vmatmul.mubr.f32.gmra.mrb[0].mxu0 %v98
    %v219 = vpop.f32.mrb[0].mxu0
    %v220 = vadd.f32 %v121, %v219
    %v221 = vpop.f32.mrb[0].mxu0
    %222 = vmatprep.mubr.f32.mxu0 0.0
    %223 = vmatmul.mubr.f32.gmra.mrb[0].mxu0 %v99
    %v224 = vpop.f32.mrb[0].mxu0
    %v225 = vadd.f32 %v121, %v224
    %v226 = vpop.f32.mrb[0].mxu0
    %227 = vdwg.mxu0
    %v228 = vmax.f32 %v190, 0.0
    %v229 = vmax.f32 %v195, 0.0
    %v230 = vmax.f32 %v200, 0.0
    %v231 = vmax.f32 %v205, 0.0
    %v232 = vmax.f32 %v210, 0.0
    %v233 = vmax.f32 %v215, 0.0
    %v234 = vmax.f32 %v220, 0.0
    %v235 = vmax.f32 %v225, 0.0
    %v236 = vld [vmem:[%s2] sm:$0xff]
    %v237 = vld [vmem:[%s2 + $0x8] sm:$0xff]
    %v238 = vld [vmem:[%s2 + $0x10] sm:$0xff]
    %v239 = vld [vmem:[%s2 + $0x18] sm:$0xff]
    %v240 = vld [vmem:[%s2 + $0x20] sm:$0xff]
    %v241 = vld [vmem:[%s2 + $0x28] sm:$0xff]
    %v242 = vld [vmem:[%s2 + $0x30] sm:$0xff]
    %v243 = vld [vmem:[%s2 + $0x38] sm:$0xff]
    %v244 = vld [vmem:[%s2 + $0x40] sm:$0xff]
    %v245 = vld [vmem:[%s2 + $0x48] sm:$0xff]
    %v246 = vld [vmem:[%s2 + $0x50] sm:$0xff]
    %v247 = vld [vmem:[%s2 + $0x58] sm:$0xff]
    %v248 = vld [vmem:[%s2 + $0x60] sm:$0xff]
    %v249 = vld [vmem:[%s2 + $0x68] sm:$0xff]
    %v250 = vld [vmem:[%s2 + $0x70] sm:$0xff]
    %v251 = vld [vmem:[%s2 + $0x78] sm:$0xff]
    %v252 = vld [vmem:[%s9] sm:$0x1]
    %v254 = vlaneseq
    %v255 = vshrl.u32 %v254, 7
    %v256 = vsub.s32 0, %v255
    %v257 = vrot.slane %v252, %v256
    %259 = vmatprep.subr.mxu0 0.0
    %260 = vmatpush1.msra.mxu0 %v236
    %261 = vmatprep.subr.mxu0 0.0
    %262 = vmatpush1.msra.mxu0 %v237
    %263 = vmatprep.subr.mxu0 0.0
    %264 = vmatpush1.msra.mxu0 %v238
    %265 = vmatprep.subr.mxu0 0.0
    %266 = vmatpush1.msra.mxu0 %v239
    %267 = vmatprep.subr.mxu0 0.0
    %268 = vmatpush1.msra.mxu0 %v240
    %269 = vmatprep.subr.mxu0 0.0
    %270 = vmatpush1.msra.mxu0 %v241
    %271 = vmatprep.subr.mxu0 0.0
    %272 = vmatpush1.msra.mxu0 %v242
    %273 = vmatprep.subr.mxu0 0.0
    %274 = vmatpush1.msra.mxu0 %v243
    %275 = vmatprep.subr.mxu0 0.0
    %276 = vmatpush1.msra.mxu0 %v244
    %277 = vmatprep.subr.mxu0 0.0
    %278 = vmatpush1.msra.mxu0 %v245
    %279 = vmatprep.subr.mxu0 0.0
    %280 = vmatpush1.msra.mxu0 %v246
    %281 = vmatprep.subr.mxu0 0.0
    %282 = vmatpush1.msra.mxu0 %v247
    %283 = vmatprep.subr.mxu0 0.0
    %284 = vmatpush1.msra.mxu0 %v248
    %285 = vmatprep.subr.mxu0 0.0
    %286 = vmatpush1.msra.mxu0 %v249
    %287 = vmatprep.subr.mxu0 0.0
    %288 = vmatpush1.msra.mxu0 %v250
    %289 = vmatprep.subr.mxu0 0.0
    %290 = vmatpush1.msra.mxu0 %v251
    %291 = vmatprep.subr.mxu0 0.0
    %292 = vmatpush1.msra.mxu0 0.0
    %293 = vmatprep.subr.mxu0 0.0
    %294 = vmatpush1.msra.mxu0 0.0
    %295 = vmatprep.subr.mxu0 0.0
    %296 = vmatpush1.msra.mxu0 0.0
    %297 = vmatprep.subr.mxu0 0.0
    %298 = vmatpush1.msra.mxu0 0.0
    %299 = vmatprep.subr.mxu0 0.0
    %300 = vmatpush1.msra.mxu0 0.0
    %301 = vmatprep.subr.mxu0 0.0
    %302 = vmatpush1.msra.mxu0 0.0
    %303 = vmatprep.subr.mxu0 0.0
    %304 = vmatpush1.msra.mxu0 0.0
    %305 = vmatprep.subr.mxu0 0.0
    %306 = vmatpush1.msra.mxu0 0.0
    %307 = vmatprep.subr.mxu0 0.0
    %308 = vmatpush1.msra.mxu0 0.0
    %309 = vmatprep.subr.mxu0 0.0
    %310 = vmatpush1.msra.mxu0 0.0
    %311 = vmatprep.subr.mxu0 0.0
    %312 = vmatpush1.msra.mxu0 0.0
    %313 = vmatprep.subr.mxu0 0.0
    %314 = vmatpush1.msra.mxu0 0.0
    %315 = vmatprep.subr.mxu0 0.0
    %316 = vmatpush1.msra.mxu0 0.0
    %317 = vmatprep.subr.mxu0 0.0
    %318 = vmatpush1.msra.mxu0 0.0
    %319 = vmatprep.subr.mxu0 0.0
    %320 = vmatpush1.msra.mxu0 0.0
    %321 = vmatprep.subr.mxu0 0.0
    %322 = vmatpush1.msra.mxu0 0.0
    %323 = vmatprep.mubr.f32.mxu0 0.0
    %324 = vmatmul.mubr.f32.gmra.mrb[0].mxu0 %v228
    %v325 = vpop.f32.mrb[0].mxu0
    %v326 = vadd.f32 %v257, %v325
    %v327 = vpop.f32.mrb[0].mxu0
    %328 = vmatprep.mubr.f32.mxu0 0.0
    %329 = vmatmul.mubr.f32.gmra.mrb[0].mxu0 %v229
    %v330 = vpop.f32.mrb[0].mxu0
    %v331 = vadd.f32 %v257, %v330
    %v332 = vpop.f32.mrb[0].mxu0
    %333 = vmatprep.mubr.f32.mxu0 0.0
    %334 = vmatmul.mubr.f32.gmra.mrb[0].mxu0 %v230
    %v335 = vpop.f32.mrb[0].mxu0
    %v336 = vadd.f32 %v257, %v335
    %v337 = vpop.f32.mrb[0].mxu0
    %338 = vmatprep.mubr.f32.mxu0 0.0
    %339 = vmatmul.mubr.f32.gmra.mrb[0].mxu0 %v231
    %v340 = vpop.f32.mrb[0].mxu0
    %v341 = vadd.f32 %v257, %v340
    %v342 = vpop.f32.mrb[0].mxu0
    %343 = vmatprep.mubr.f32.mxu0 0.0
    %344 = vmatmul.mubr.f32.gmra.mrb[0].mxu0 %v232
    %v345 = vpop.f32.mrb[0].mxu0
    %v346 = vadd.f32 %v257, %v345
    %v347 = vpop.f32.mrb[0].mxu0
    %348 = vmatprep.mubr.f32.mxu0 0.0
    %349 = vmatmul.mubr.f32.gmra.mrb[0].mxu0 %v233
    %v350 = vpop.f32.mrb[0].mxu0
    %v351 = vadd.f32 %v257, %v350
    %v352 = vpop.f32.mrb[0].mxu0
    %353 = vmatprep.mubr.f32.mxu0 0.0
    %354 = vmatmul.mubr.f32.gmra.mrb[0].mxu0 %v234
    %v355 = vpop.f32.mrb[0].mxu0
    %v356 = vadd.f32 %v257, %v355
    %v357 = vpop.f32.mrb[0].mxu0
    %358 = vmatprep.mubr.f32.mxu0 0.0
    %359 = vmatmul.mubr.f32.gmra.mrb[0].mxu0 %v235
    %v360 = vpop.f32.mrb[0].mxu0
    %v361 = vadd.f32 %v257, %v360
    %v362 = vpop.f32.mrb[0].mxu0
    %363 = vdwg.mxu0
    %v364 = vmax.f32 %v326, 0.0
    %v365 = vmax.f32 %v331, 0.0
    %v366 = vmax.f32 %v336, 0.0
    %v367 = vmax.f32 %v341, 0.0
    %v368 = vmax.f32 %v346, 0.0
    %v369 = vmax.f32 %v351, 0.0
    %v370 = vmax.f32 %v356, 0.0
    %v371 = vmax.f32 %v361, 0.0
    %v372 = vld [vmem:[%s3] sm:$0xff]
    %v373 = vld [vmem:[%s3 + $0x8] sm:$0xff]
    %v374 = vld [vmem:[%s3 + $0x10] sm:$0xff]
    %v375 = vld [vmem:[%s3 + $0x18] sm:$0xff]
    %v376 = vld [vmem:[%s10] sm:$0x1]
    %v378 = vlaneseq
    %v379 = vshrl.u32 %v378, 7
    %v380 = vsub.s32 0, %v379
    %v381 = vrot.slane %v376, %v380
    %vm383 = vcmask 261120
    %v385 = vsel %vm383, %v364, 0
    %v388 = vsel %vm383, %v365, 0
    %v391 = vsel %vm383, %v366, 0
    %v394 = vsel %vm383, %v367, 0
    %v397 = vsel %vm383, %v368, 0
    %v400 = vsel %vm383, %v369, 0
    %v403 = vsel %vm383, %v370, 0
    %v406 = vsel %vm383, %v371, 0
    %408 = vmatprep.subr.mxu0 0.0
    %409 = vmatpush1.msra.mxu0 %v372
    %410 = vmatprep.subr.mxu0 0.0
    %411 = vmatpush1.msra.mxu0 %v373
    %412 = vmatprep.subr.mxu0 0.0
    %413 = vmatpush1.msra.mxu0 %v374
    %414 = vmatprep.subr.mxu0 0.0
    %415 = vmatpush1.msra.mxu0 %v375
    %416 = vmatprep.subr.mxu0 0.0
    %417 = vmatpush1.msra.mxu0 0.0
    %418 = vmatprep.subr.mxu0 0.0
    %419 = vmatpush1.msra.mxu0 0.0
    %420 = vmatprep.subr.mxu0 0.0
    %421 = vmatpush1.msra.mxu0 0.0
    %422 = vmatprep.subr.mxu0 0.0
    %423 = vmatpush1.msra.mxu0 0.0
    %424 = vmatprep.subr.mxu0 0.0
    %425 = vmatpush1.msra.mxu0 0.0
    %426 = vmatprep.subr.mxu0 0.0
    %427 = vmatpush1.msra.mxu0 0.0
    %428 = vmatprep.subr.mxu0 0.0
    %429 = vmatpush1.msra.mxu0 0.0
    %430 = vmatprep.subr.mxu0 0.0
    %431 = vmatpush1.msra.mxu0 0.0
    %432 = vmatprep.subr.mxu0 0.0
    %433 = vmatpush1.msra.mxu0 0.0
    %434 = vmatprep.subr.mxu0 0.0
    %435 = vmatpush1.msra.mxu0 0.0
    %436 = vmatprep.subr.mxu0 0.0
    %437 = vmatpush1.msra.mxu0 0.0
    %438 = vmatprep.subr.mxu0 0.0
    %439 = vmatpush1.msra.mxu0 0.0
    %440 = vmatprep.subr.mxu0 0.0
    %441 = vmatpush1.msra.mxu0 0.0
    %442 = vmatprep.subr.mxu0 0.0
    %443 = vmatpush1.msra.mxu0 0.0
    %444 = vmatprep.subr.mxu0 0.0
    %445 = vmatpush1.msra.mxu0 0.0
    %446 = vmatprep.subr.mxu0 0.0
    %447 = vmatpush1.msra.mxu0 0.0
    %448 = vmatprep.subr.mxu0 0.0
    %449 = vmatpush1.msra.mxu0 0.0
    %450 = vmatprep.subr.mxu0 0.0
    %451 = vmatpush1.msra.mxu0 0.0
    %452 = vmatprep.subr.mxu0 0.0
    %453 = vmatpush1.msra.mxu0 0.0
    %454 = vmatprep.subr.mxu0 0.0
    %455 = vmatpush1.msra.mxu0 0.0
    %456 = vmatprep.subr.mxu0 0.0
    %457 = vmatpush1.msra.mxu0 0.0
    %458 = vmatprep.subr.mxu0 0.0
    %459 = vmatpush1.msra.mxu0 0.0
    %460 = vmatprep.subr.mxu0 0.0
    %461 = vmatpush1.msra.mxu0 0.0
    %462 = vmatprep.subr.mxu0 0.0
    %463 = vmatpush1.msra.mxu0 0.0
    %464 = vmatprep.subr.mxu0 0.0
    %465 = vmatpush1.msra.mxu0 0.0
    %466 = vmatprep.subr.mxu0 0.0
    %467 = vmatpush1.msra.mxu0 0.0
    %468 = vmatprep.subr.mxu0 0.0
    %469 = vmatpush1.msra.mxu0 0.0
    %470 = vmatprep.subr.mxu0 0.0
    %471 = vmatpush1.msra.mxu0 0.0
    %472 = vmatprep.mubr.f32.mxu0 0.0
    %473 = vmatmul.mubr.f32.gmra.mrb[0].mxu0 %v385
    %v474 = vpop.f32.mrb[0].mxu0
    %v475 = vadd.f32 %v381, %v474
    %v476 = vpop.f32.mrb[0].mxu0
    %477 = vmatprep.mubr.f32.mxu0 0.0
    %478 = vmatmul.mubr.f32.gmra.mrb[0].mxu0 %v388
    %v479 = vpop.f32.mrb[0].mxu0
    %v480 = vadd.f32 %v381, %v479
    %v481 = vpop.f32.mrb[0].mxu0
    %482 = vmatprep.mubr.f32.mxu0 0.0
    %483 = vmatmul.mubr.f32.gmra.mrb[0].mxu0 %v391
    %v484 = vpop.f32.mrb[0].mxu0
    %v485 = vadd.f32 %v381, %v484
    %v486 = vpop.f32.mrb[0].mxu0
    %487 = vmatprep.mubr.f32.mxu0 0.0
    %488 = vmatmul.mubr.f32.gmra.mrb[0].mxu0 %v394
    %v489 = vpop.f32.mrb[0].mxu0
    %v490 = vadd.f32 %v381, %v489
    %v491 = vpop.f32.mrb[0].mxu0
    %492 = vmatprep.mubr.f32.mxu0 0.0
    %493 = vmatmul.mubr.f32.gmra.mrb[0].mxu0 %v397
    %v494 = vpop.f32.mrb[0].mxu0
    %v495 = vadd.f32 %v381, %v494
    %v496 = vpop.f32.mrb[0].mxu0
    %497 = vmatprep.mubr.f32.mxu0 0.0
    %498 = vmatmul.mubr.f32.gmra.mrb[0].mxu0 %v400
    %v499 = vpop.f32.mrb[0].mxu0
    %v500 = vadd.f32 %v381, %v499
    %v501 = vpop.f32.mrb[0].mxu0
    %502 = vmatprep.mubr.f32.mxu0 0.0
    %503 = vmatmul.mubr.f32.gmra.mrb[0].mxu0 %v403
    %v504 = vpop.f32.mrb[0].mxu0
    %v505 = vadd.f32 %v381, %v504
    %v506 = vpop.f32.mrb[0].mxu0
    %507 = vmatprep.mubr.f32.mxu0 0.0
    %508 = vmatmul.mubr.f32.gmra.mrb[0].mxu0 %v406
    %v509 = vpop.f32.mrb[0].mxu0
    %v510 = vadd.f32 %v381, %v509
    %v511 = vpop.f32.mrb[0].mxu0
    %512 = vdwg.mxu0
    %v513 = vmax.f32 %v475, 0.0
    %v514 = vmax.f32 %v480, 0.0
    %v515 = vmax.f32 %v485, 0.0
    %v516 = vmax.f32 %v490, 0.0
    %v517 = vmax.f32 %v495, 0.0
    %v518 = vmax.f32 %v500, 0.0
    %v519 = vmax.f32 %v505, 0.0
    %v520 = vmax.f32 %v510, 0.0
    %v521 = vld [vmem:[#allocation2] sm:$0xff]
    %v522 = vld [vmem:[#allocation2 + $0x8] sm:$0xf]
    %v523 = vld [vmem:[%s11] sm:$0x1]
    %v525 = vlaneseq
    %v526 = vshrl.u32 %v525, 7
    %v527 = vsub.s32 0, %v526
    %v528 = vrot.slane %v523, %v527
    %vm530 = vcmask 97280
    %v532 = vsel %vm530, %v513, 0
    %v535 = vsel %vm530, %v514, 0
    %v538 = vsel %vm530, %v515, 0
    %v541 = vsel %vm530, %v516, 0
    %v544 = vsel %vm530, %v517, 0
    %v547 = vsel %vm530, %v518, 0
    %v550 = vsel %vm530, %v519, 0
    %v553 = vsel %vm530, %v520, 0
    %vm555 = vcmask 1043456
    %v557 = vsel %vm555, %v522, 0
    %559 = vmatprep.subr.mxu0 0.0
    %560 = vmatpush1.msra.mxu0 %v521
    %561 = vmatprep.subr.mxu0 0.0
    %562 = vmatpush1.msra.mxu0 %v557
    %563 = vmatprep.subr.mxu0 0.0
    %564 = vmatpush1.msra.mxu0 0.0
    %565 = vmatprep.subr.mxu0 0.0
    %566 = vmatpush1.msra.mxu0 0.0
    %567 = vmatprep.subr.mxu0 0.0
    %568 = vmatpush1.msra.mxu0 0.0
    %569 = vmatprep.subr.mxu0 0.0
    %570 = vmatpush1.msra.mxu0 0.0
    %571 = vmatprep.subr.mxu0 0.0
    %572 = vmatpush1.msra.mxu0 0.0
    %573 = vmatprep.subr.mxu0 0.0
    %574 = vmatpush1.msra.mxu0 0.0
    %575 = vmatprep.subr.mxu0 0.0
    %576 = vmatpush1.msra.mxu0 0.0
    %577 = vmatprep.subr.mxu0 0.0
    %578 = vmatpush1.msra.mxu0 0.0
    %579 = vmatprep.subr.mxu0 0.0
    %580 = vmatpush1.msra.mxu0 0.0
    %581 = vmatprep.subr.mxu0 0.0
    %582 = vmatpush1.msra.mxu0 0.0
    %583 = vmatprep.subr.mxu0 0.0
    %584 = vmatpush1.msra.mxu0 0.0
    %585 = vmatprep.subr.mxu0 0.0
    %586 = vmatpush1.msra.mxu0 0.0
    %587 = vmatprep.subr.mxu0 0.0
    %588 = vmatpush1.msra.mxu0 0.0
    %589 = vmatprep.subr.mxu0 0.0
    %590 = vmatpush1.msra.mxu0 0.0
    %591 = vmatprep.subr.mxu0 0.0
    %592 = vmatpush1.msra.mxu0 0.0
    %593 = vmatprep.subr.mxu0 0.0
    %594 = vmatpush1.msra.mxu0 0.0
    %595 = vmatprep.subr.mxu0 0.0
    %596 = vmatpush1.msra.mxu0 0.0
    %597 = vmatprep.subr.mxu0 0.0
    %598 = vmatpush1.msra.mxu0 0.0
    %599 = vmatprep.subr.mxu0 0.0
    %600 = vmatpush1.msra.mxu0 0.0
    %601 = vmatprep.subr.mxu0 0.0
    %602 = vmatpush1.msra.mxu0 0.0
    %603 = vmatprep.subr.mxu0 0.0
    %604 = vmatpush1.msra.mxu0 0.0
    %605 = vmatprep.subr.mxu0 0.0
    %606 = vmatpush1.msra.mxu0 0.0
    %607 = vmatprep.subr.mxu0 0.0
    %608 = vmatpush1.msra.mxu0 0.0
    %609 = vmatprep.subr.mxu0 0.0
    %610 = vmatpush1.msra.mxu0 0.0
    %611 = vmatprep.subr.mxu0 0.0
    %612 = vmatpush1.msra.mxu0 0.0
    %613 = vmatprep.subr.mxu0 0.0
    %614 = vmatpush1.msra.mxu0 0.0
    %615 = vmatprep.subr.mxu0 0.0
    %616 = vmatpush1.msra.mxu0 0.0
    %617 = vmatprep.subr.mxu0 0.0
    %618 = vmatpush1.msra.mxu0 0.0
    %619 = vmatprep.subr.mxu0 0.0
    %620 = vmatpush1.msra.mxu0 0.0
    %621 = vmatprep.subr.mxu0 0.0
    %622 = vmatpush1.msra.mxu0 0.0
    %623 = vmatprep.mubr.f32.mxu0 0.0
    %624 = vmatmul.mubr.f32.gmra.mrb[0].mxu0 %v532
    %v625 = vpop.f32.mrb[0].mxu0
    %v626 = vadd.f32 %v528, %v625
    %v627 = vpop.f32.mrb[0].mxu0
    %628 = vmatprep.mubr.f32.mxu0 0.0
    %629 = vmatmul.mubr.f32.gmra.mrb[0].mxu0 %v535
    %v630 = vpop.f32.mrb[0].mxu0
    %v631 = vadd.f32 %v528, %v630
    %v632 = vpop.f32.mrb[0].mxu0
    %633 = vmatprep.mubr.f32.mxu0 0.0
    %634 = vmatmul.mubr.f32.gmra.mrb[0].mxu0 %v538
    %v635 = vpop.f32.mrb[0].mxu0
    %v636 = vadd.f32 %v528, %v635
    %v637 = vpop.f32.mrb[0].mxu0
    %638 = vmatprep.mubr.f32.mxu0 0.0
    %639 = vmatmul.mubr.f32.gmra.mrb[0].mxu0 %v541
    %v640 = vpop.f32.mrb[0].mxu0
    %v641 = vadd.f32 %v528, %v640
    %v642 = vpop.f32.mrb[0].mxu0
    %643 = vmatprep.mubr.f32.mxu0 0.0
    %644 = vmatmul.mubr.f32.gmra.mrb[0].mxu0 %v544
    %v645 = vpop.f32.mrb[0].mxu0
    %v646 = vadd.f32 %v528, %v645
    %v647 = vpop.f32.mrb[0].mxu0
    %648 = vmatprep.mubr.f32.mxu0 0.0
    %649 = vmatmul.mubr.f32.gmra.mrb[0].mxu0 %v547
    %v650 = vpop.f32.mrb[0].mxu0
    %v651 = vadd.f32 %v528, %v650
    %v652 = vpop.f32.mrb[0].mxu0
    %653 = vmatprep.mubr.f32.mxu0 0.0
    %654 = vmatmul.mubr.f32.gmra.mrb[0].mxu0 %v550
    %v655 = vpop.f32.mrb[0].mxu0
    %v656 = vadd.f32 %v528, %v655
    %v657 = vpop.f32.mrb[0].mxu0
    %658 = vmatprep.mubr.f32.mxu0 0.0
    %659 = vmatmul.mubr.f32.gmra.mrb[0].mxu0 %v553
    %v660 = vpop.f32.mrb[0].mxu0
    %v661 = vadd.f32 %v528, %v660
    %v662 = vpop.f32.mrb[0].mxu0
    %663 = vdwg.mxu0
    %v664 = vmax.f32 %v626, 0.0
    %v665 = vmax.f32 %v631, 0.0
    %v666 = vmax.f32 %v636, 0.0
    %v667 = vmax.f32 %v641, 0.0
    %v668 = vmax.f32 %v646, 0.0
    %v669 = vmax.f32 %v651, 0.0
    %v670 = vmax.f32 %v656, 0.0
    %v671 = vmax.f32 %v661, 0.0
    %v672 = vld [vmem:[#allocation5] sm:$0xff]
    %v673 = vld [vmem:[#allocation5 + $0x8] sm:$0xf]
    %v674 = vld [vmem:[%s12] sm:$0x1]
    %v676 = vlaneseq
    %v677 = vshrl.u32 %v676, 7
    %v678 = vsub.s32 0, %v677
    %v679 = vrot.slane %v674, %v678
    %v682 = vsel %vm530, %v664, 0
    %v685 = vsel %vm530, %v665, 0
    %v688 = vsel %vm530, %v666, 0
    %v691 = vsel %vm530, %v667, 0
    %v694 = vsel %vm530, %v668, 0
    %v697 = vsel %vm530, %v669, 0
    %v700 = vsel %vm530, %v670, 0
    %v703 = vsel %vm530, %v671, 0
    %v706 = vsel %vm555, %v673, 0
    %708 = vmatprep.subr.mxu0 0.0
    %709 = vmatpush1.msra.mxu0 %v672
    %710 = vmatprep.subr.mxu0 0.0
    %711 = vmatpush1.msra.mxu0 %v706
    %712 = vmatprep.subr.mxu0 0.0
    %713 = vmatpush1.msra.mxu0 0.0
    %714 = vmatprep.subr.mxu0 0.0
    %715 = vmatpush1.msra.mxu0 0.0
    %716 = vmatprep.subr.mxu0 0.0
    %717 = vmatpush1.msra.mxu0 0.0
    %718 = vmatprep.subr.mxu0 0.0
    %719 = vmatpush1.msra.mxu0 0.0
    %720 = vmatprep.subr.mxu0 0.0
    %721 = vmatpush1.msra.mxu0 0.0
    %722 = vmatprep.subr.mxu0 0.0
    %723 = vmatpush1.msra.mxu0 0.0
    %724 = vmatprep.subr.mxu0 0.0
    %725 = vmatpush1.msra.mxu0 0.0
    %726 = vmatprep.subr.mxu0 0.0
    %727 = vmatpush1.msra.mxu0 0.0
    %728 = vmatprep.subr.mxu0 0.0
    %729 = vmatpush1.msra.mxu0 0.0
    %730 = vmatprep.subr.mxu0 0.0
    %731 = vmatpush1.msra.mxu0 0.0
    %732 = vmatprep.subr.mxu0 0.0
    %733 = vmatpush1.msra.mxu0 0.0
    %734 = vmatprep.subr.mxu0 0.0
    %735 = vmatpush1.msra.mxu0 0.0
    %736 = vmatprep.subr.mxu0 0.0
    %737 = vmatpush1.msra.mxu0 0.0
    %738 = vmatprep.subr.mxu0 0.0
    %739 = vmatpush1.msra.mxu0 0.0
    %740 = vmatprep.subr.mxu0 0.0
    %741 = vmatpush1.msra.mxu0 0.0
    %742 = vmatprep.subr.mxu0 0.0
    %743 = vmatpush1.msra.mxu0 0.0
    %744 = vmatprep.subr.mxu0 0.0
    %745 = vmatpush1.msra.mxu0 0.0
    %746 = vmatprep.subr.mxu0 0.0
    %747 = vmatpush1.msra.mxu0 0.0
    %748 = vmatprep.subr.mxu0 0.0
    %749 = vmatpush1.msra.mxu0 0.0
    %750 = vmatprep.subr.mxu0 0.0
    %751 = vmatpush1.msra.mxu0 0.0
    %752 = vmatprep.subr.mxu0 0.0
    %753 = vmatpush1.msra.mxu0 0.0
    %754 = vmatprep.subr.mxu0 0.0
    %755 = vmatpush1.msra.mxu0 0.0
    %756 = vmatprep.subr.mxu0 0.0
    %757 = vmatpush1.msra.mxu0 0.0
    %758 = vmatprep.subr.mxu0 0.0
    %759 = vmatpush1.msra.mxu0 0.0
    %760 = vmatprep.subr.mxu0 0.0
    %761 = vmatpush1.msra.mxu0 0.0
    %762 = vmatprep.subr.mxu0 0.0
    %763 = vmatpush1.msra.mxu0 0.0
    %764 = vmatprep.subr.mxu0 0.0
    %765 = vmatpush1.msra.mxu0 0.0
    %766 = vmatprep.subr.mxu0 0.0
    %767 = vmatpush1.msra.mxu0 0.0
    %768 = vmatprep.subr.mxu0 0.0
    %769 = vmatpush1.msra.mxu0 0.0
    %770 = vmatprep.subr.mxu0 0.0
    %771 = vmatpush1.msra.mxu0 0.0
    %772 = vmatprep.mubr.f32.mxu0 0.0
    %773 = vmatmul.mubr.f32.gmra.mrb[0].mxu0 %v682
    %v774 = vpop.f32.mrb[0].mxu0
    %v775 = vadd.f32 %v679, %v774
    %v776 = vpop.f32.mrb[0].mxu0
    %777 = vmatprep.mubr.f32.mxu0 0.0
    %778 = vmatmul.mubr.f32.gmra.mrb[0].mxu0 %v685
    %v779 = vpop.f32.mrb[0].mxu0
    %v780 = vadd.f32 %v679, %v779
    %v781 = vpop.f32.mrb[0].mxu0
    %782 = vmatprep.mubr.f32.mxu0 0.0
    %783 = vmatmul.mubr.f32.gmra.mrb[0].mxu0 %v688
    %v784 = vpop.f32.mrb[0].mxu0
    %v785 = vadd.f32 %v679, %v784
    %v786 = vpop.f32.mrb[0].mxu0
    %787 = vmatprep.mubr.f32.mxu0 0.0
    %788 = vmatmul.mubr.f32.gmra.mrb[0].mxu0 %v691
    %v789 = vpop.f32.mrb[0].mxu0
    %v790 = vadd.f32 %v679, %v789
    %v791 = vpop.f32.mrb[0].mxu0
    %792 = vmatprep.mubr.f32.mxu0 0.0
    %793 = vmatmul.mubr.f32.gmra.mrb[0].mxu0 %v694
    %v794 = vpop.f32.mrb[0].mxu0
    %v795 = vadd.f32 %v679, %v794
    %v796 = vpop.f32.mrb[0].mxu0
    %797 = vmatprep.mubr.f32.mxu0 0.0
    %798 = vmatmul.mubr.f32.gmra.mrb[0].mxu0 %v697
    %v799 = vpop.f32.mrb[0].mxu0
    %v800 = vadd.f32 %v679, %v799
    %v801 = vpop.f32.mrb[0].mxu0
    %802 = vmatprep.mubr.f32.mxu0 0.0
    %803 = vmatmul.mubr.f32.gmra.mrb[0].mxu0 %v700
    %v804 = vpop.f32.mrb[0].mxu0
    %v805 = vadd.f32 %v679, %v804
    %v806 = vpop.f32.mrb[0].mxu0
    %807 = vmatprep.mubr.f32.mxu0 0.0
    %808 = vmatmul.mubr.f32.gmra.mrb[0].mxu0 %v703
    %v809 = vpop.f32.mrb[0].mxu0
    %v810 = vadd.f32 %v679, %v809
    %v811 = vpop.f32.mrb[0].mxu0
    %812 = vdwg.mxu0
    %v813 = vmax.f32 %v775, 0.0
    %v814 = vmax.f32 %v780, 0.0
    %v815 = vmax.f32 %v785, 0.0
    %v816 = vmax.f32 %v790, 0.0
    %v817 = vmax.f32 %v795, 0.0
    %v818 = vmax.f32 %v800, 0.0
    %v819 = vmax.f32 %v805, 0.0
    %v820 = vmax.f32 %v810, 0.0
    %v821 = vld [vmem:[%s6] sm:$0xff]
    %v822 = vld [vmem:[%s6 + $0x8] sm:$0xff]
    %v823 = vld [vmem:[%s6 + $0x10] sm:$0xff]
    %v824 = vld [vmem:[%s6 + $0x18] sm:$0xff]
    %v825 = vld [vmem:[%s13] sm:$0x1]
    %v827 = vlaneseq
    %v828 = vshrl.u32 %v827, 7
    %v829 = vsub.s32 0, %v828
    %v830 = vrot.slane %v825, %v829
    %v833 = vsel %vm383, %v813, 0
    %v836 = vsel %vm383, %v814, 0
    %v839 = vsel %vm383, %v815, 0
    %v842 = vsel %vm383, %v816, 0
    %v845 = vsel %vm383, %v817, 0
    %v848 = vsel %vm383, %v818, 0
    %v851 = vsel %vm383, %v819, 0
    %v854 = vsel %vm383, %v820, 0
    %856 = vmatprep.subr.mxu0 0.0
    %857 = vmatpush1.msra.mxu0 %v821
    %858 = vmatprep.subr.mxu0 0.0
    %859 = vmatpush1.msra.mxu0 %v822
    %860 = vmatprep.subr.mxu0 0.0
    %861 = vmatpush1.msra.mxu0 %v823
    %862 = vmatprep.subr.mxu0 0.0
    %863 = vmatpush1.msra.mxu0 %v824
    %864 = vmatprep.subr.mxu0 0.0
    %865 = vmatpush1.msra.mxu0 0.0
    %866 = vmatprep.subr.mxu0 0.0
    %867 = vmatpush1.msra.mxu0 0.0
    %868 = vmatprep.subr.mxu0 0.0
    %869 = vmatpush1.msra.mxu0 0.0
    %870 = vmatprep.subr.mxu0 0.0
    %871 = vmatpush1.msra.mxu0 0.0
    %872 = vmatprep.subr.mxu0 0.0
    %873 = vmatpush1.msra.mxu0 0.0
    %874 = vmatprep.subr.mxu0 0.0
    %875 = vmatpush1.msra.mxu0 0.0
    %876 = vmatprep.subr.mxu0 0.0
    %877 = vmatpush1.msra.mxu0 0.0
    %878 = vmatprep.subr.mxu0 0.0
    %879 = vmatpush1.msra.mxu0 0.0
    %880 = vmatprep.subr.mxu0 0.0
    %881 = vmatpush1.msra.mxu0 0.0
    %882 = vmatprep.subr.mxu0 0.0
    %883 = vmatpush1.msra.mxu0 0.0
    %884 = vmatprep.subr.mxu0 0.0
    %885 = vmatpush1.msra.mxu0 0.0
    %886 = vmatprep.subr.mxu0 0.0
    %887 = vmatpush1.msra.mxu0 0.0
    %888 = vmatprep.subr.mxu0 0.0
    %889 = vmatpush1.msra.mxu0 0.0
    %890 = vmatprep.subr.mxu0 0.0
    %891 = vmatpush1.msra.mxu0 0.0
    %892 = vmatprep.subr.mxu0 0.0
    %893 = vmatpush1.msra.mxu0 0.0
    %894 = vmatprep.subr.mxu0 0.0
    %895 = vmatpush1.msra.mxu0 0.0
    %896 = vmatprep.subr.mxu0 0.0
    %897 = vmatpush1.msra.mxu0 0.0
    %898 = vmatprep.subr.mxu0 0.0
    %899 = vmatpush1.msra.mxu0 0.0
    %900 = vmatprep.subr.mxu0 0.0
    %901 = vmatpush1.msra.mxu0 0.0
    %902 = vmatprep.subr.mxu0 0.0
    %903 = vmatpush1.msra.mxu0 0.0
    %904 = vmatprep.subr.mxu0 0.0
    %905 = vmatpush1.msra.mxu0 0.0
    %906 = vmatprep.subr.mxu0 0.0
    %907 = vmatpush1.msra.mxu0 0.0
    %908 = vmatprep.subr.mxu0 0.0
    %909 = vmatpush1.msra.mxu0 0.0
    %910 = vmatprep.subr.mxu0 0.0
    %911 = vmatpush1.msra.mxu0 0.0
    %912 = vmatprep.subr.mxu0 0.0
    %913 = vmatpush1.msra.mxu0 0.0
    %914 = vmatprep.subr.mxu0 0.0
    %915 = vmatpush1.msra.mxu0 0.0
    %916 = vmatprep.subr.mxu0 0.0
    %917 = vmatpush1.msra.mxu0 0.0
    %918 = vmatprep.subr.mxu0 0.0
    %919 = vmatpush1.msra.mxu0 0.0
    %920 = vmatprep.mubr.f32.mxu0 0.0
    %921 = vmatmul.mubr.f32.gmra.mrb[0].mxu0 %v833
    %v922 = vpop.f32.mrb[0].mxu0
    %v923 = vadd.f32 %v830, %v922
    %v924 = vpop.f32.mrb[0].mxu0
    %925 = vmatprep.mubr.f32.mxu0 0.0
    %926 = vmatmul.mubr.f32.gmra.mrb[0].mxu0 %v836
    %v927 = vpop.f32.mrb[0].mxu0
    %v928 = vadd.f32 %v830, %v927
    %v929 = vpop.f32.mrb[0].mxu0
    %930 = vmatprep.mubr.f32.mxu0 0.0
    %931 = vmatmul.mubr.f32.gmra.mrb[0].mxu0 %v839
    %v932 = vpop.f32.mrb[0].mxu0
    %v933 = vadd.f32 %v830, %v932
    %v934 = vpop.f32.mrb[0].mxu0
    %935 = vmatprep.mubr.f32.mxu0 0.0
    %936 = vmatmul.mubr.f32.gmra.mrb[0].mxu0 %v842
    %v937 = vpop.f32.mrb[0].mxu0
    %v938 = vadd.f32 %v830, %v937
    %v939 = vpop.f32.mrb[0].mxu0
    %940 = vmatprep.mubr.f32.mxu0 0.0
    %941 = vmatmul.mubr.f32.gmra.mrb[0].mxu0 %v845
    %v942 = vpop.f32.mrb[0].mxu0
    %v943 = vadd.f32 %v830, %v942
    %v944 = vpop.f32.mrb[0].mxu0
    %945 = vmatprep.mubr.f32.mxu0 0.0
    %946 = vmatmul.mubr.f32.gmra.mrb[0].mxu0 %v848
    %v947 = vpop.f32.mrb[0].mxu0
    %v948 = vadd.f32 %v830, %v947
    %v949 = vpop.f32.mrb[0].mxu0
    %950 = vmatprep.mubr.f32.mxu0 0.0
    %951 = vmatmul.mubr.f32.gmra.mrb[0].mxu0 %v851
    %v952 = vpop.f32.mrb[0].mxu0
    %v953 = vadd.f32 %v830, %v952
    %v954 = vpop.f32.mrb[0].mxu0
    %955 = vmatprep.mubr.f32.mxu0 0.0
    %956 = vmatmul.mubr.f32.gmra.mrb[0].mxu0 %v854
    %v957 = vpop.f32.mrb[0].mxu0
    %v958 = vadd.f32 %v830, %v957
    %v959 = vpop.f32.mrb[0].mxu0
    %960 = vdwg.mxu0
    %v961 = vmax.f32 %v923, 0.0
    %v962 = vmax.f32 %v928, 0.0
    %v963 = vmax.f32 %v933, 0.0
    %v964 = vmax.f32 %v938, 0.0
    %v965 = vmax.f32 %v943, 0.0
    %v966 = vmax.f32 %v948, 0.0
    %v967 = vmax.f32 %v953, 0.0
    %v968 = vmax.f32 %v958, 0.0
    %v969 = vld [vmem:[#allocation7] sm:$0xff]
    %v970 = vld [vmem:[#allocation7 + $0x8] sm:$0xff]
    %v971 = vld [vmem:[#allocation7 + $0x10] sm:$0xff]
    %v972 = vld [vmem:[#allocation7 + $0x18] sm:$0xff]
    %v973 = vld [vmem:[#allocation7 + $0x20] sm:$0xff]
    %v974 = vld [vmem:[#allocation7 + $0x28] sm:$0xff]
    %v975 = vld [vmem:[#allocation7 + $0x30] sm:$0xff]
    %v976 = vld [vmem:[#allocation7 + $0x38] sm:$0xff]
    %v977 = vld [vmem:[#allocation7 + $0x40] sm:$0xff]
    %v978 = vld [vmem:[#allocation7 + $0x48] sm:$0xff]
    %v979 = vld [vmem:[#allocation7 + $0x50] sm:$0xff]
    %v980 = vld [vmem:[#allocation7 + $0x58] sm:$0xff]
    %v981 = vld [vmem:[#allocation7 + $0x60] sm:$0xff]
    %v982 = vld [vmem:[#allocation7 + $0x68] sm:$0xff]
    %v983 = vld [vmem:[#allocation7 + $0x70] sm:$0xff]
    %v984 = vld [vmem:[#allocation7 + $0x78] sm:$0xff]
    %v985 = vld [vmem:[%s14] sm:$0x1]
    %v987 = vlaneseq
    %v988 = vshrl.u32 %v987, 7
    %v989 = vsub.s32 0, %v988
    %v990 = vrot.slane %v985, %v989
    %992 = vmatprep.subr.mxu0 0.0
    %993 = vmatpush1.msra.mxu0 %v969
    %994 = vmatprep.subr.mxu0 0.0
    %995 = vmatpush1.msra.mxu0 %v970
    %996 = vmatprep.subr.mxu0 0.0
    %997 = vmatpush1.msra.mxu0 %v971
    %998 = vmatprep.subr.mxu0 0.0
    %999 = vmatpush1.msra.mxu0 %v972
    %1000 = vmatprep.subr.mxu0 0.0
    %1001 = vmatpush1.msra.mxu0 %v973
    %1002 = vmatprep.subr.mxu0 0.0
    %1003 = vmatpush1.msra.mxu0 %v974
    %1004 = vmatprep.subr.mxu0 0.0
    %1005 = vmatpush1.msra.mxu0 %v975
    %1006 = vmatprep.subr.mxu0 0.0
    %1007 = vmatpush1.msra.mxu0 %v976
    %1008 = vmatprep.subr.mxu0 0.0
    %1009 = vmatpush1.msra.mxu0 %v977
    %1010 = vmatprep.subr.mxu0 0.0
    %1011 = vmatpush1.msra.mxu0 %v978
    %1012 = vmatprep.subr.mxu0 0.0
    %1013 = vmatpush1.msra.mxu0 %v979
    %1014 = vmatprep.subr.mxu0 0.0
    %1015 = vmatpush1.msra.mxu0 %v980
    %1016 = vmatprep.subr.mxu0 0.0
    %1017 = vmatpush1.msra.mxu0 %v981
    %1018 = vmatprep.subr.mxu0 0.0
    %1019 = vmatpush1.msra.mxu0 %v982
    %1020 = vmatprep.subr.mxu0 0.0
    %1021 = vmatpush1.msra.mxu0 %v983
    %1022 = vmatprep.subr.mxu0 0.0
    %1023 = vmatpush1.msra.mxu0 %v984
    %1024 = vmatprep.subr.mxu0 0.0
    %1025 = vmatpush1.msra.mxu0 0.0
    %1026 = vmatprep.subr.mxu0 0.0
    %1027 = vmatpush1.msra.mxu0 0.0
    %1028 = vmatprep.subr.mxu0 0.0
    %1029 = vmatpush1.msra.mxu0 0.0
    %1030 = vmatprep.subr.mxu0 0.0
    %1031 = vmatpush1.msra.mxu0 0.0
    %1032 = vmatprep.subr.mxu0 0.0
    %1033 = vmatpush1.msra.mxu0 0.0
    %1034 = vmatprep.subr.mxu0 0.0
    %1035 = vmatpush1.msra.mxu0 0.0
    %1036 = vmatprep.subr.mxu0 0.0
    %1037 = vmatpush1.msra.mxu0 0.0
    %1038 = vmatprep.subr.mxu0 0.0
    %1039 = vmatpush1.msra.mxu0 0.0
    %1040 = vmatprep.subr.mxu0 0.0
    %1041 = vmatpush1.msra.mxu0 0.0
    %1042 = vmatprep.subr.mxu0 0.0
    %1043 = vmatpush1.msra.mxu0 0.0
    %1044 = vmatprep.subr.mxu0 0.0
    %1045 = vmatpush1.msra.mxu0 0.0
    %1046 = vmatprep.subr.mxu0 0.0
    %1047 = vmatpush1.msra.mxu0 0.0
    %1048 = vmatprep.subr.mxu0 0.0
    %1049 = vmatpush1.msra.mxu0 0.0
    %1050 = vmatprep.subr.mxu0 0.0
    %1051 = vmatpush1.msra.mxu0 0.0
    %1052 = vmatprep.subr.mxu0 0.0
    %1053 = vmatpush1.msra.mxu0 0.0
    %1054 = vmatprep.subr.mxu0 0.0
    %1055 = vmatpush1.msra.mxu0 0.0
    %1056 = vmatprep.mubr.f32.mxu0 0.0
    %1057 = vmatmul.mubr.f32.gmra.mrb[0].mxu0 %v961
    %v1058 = vpop.f32.mrb[0].mxu0
    %v1059 = vadd.f32 %v990, %v1058
    %v1060 = vpop.f32.mrb[0].mxu0
    %1061 = vmatprep.mubr.f32.mxu0 0.0
    %1062 = vmatmul.mubr.f32.gmra.mrb[0].mxu0 %v962
    %v1063 = vpop.f32.mrb[0].mxu0
    %v1064 = vadd.f32 %v990, %v1063
    %v1065 = vpop.f32.mrb[0].mxu0
    %1066 = vmatprep.mubr.f32.mxu0 0.0
    %1067 = vmatmul.mubr.f32.gmra.mrb[0].mxu0 %v963
    %v1068 = vpop.f32.mrb[0].mxu0
    %v1069 = vadd.f32 %v990, %v1068
    %v1070 = vpop.f32.mrb[0].mxu0
    %1071 = vmatprep.mubr.f32.mxu0 0.0
    %1072 = vmatmul.mubr.f32.gmra.mrb[0].mxu0 %v964
    %v1073 = vpop.f32.mrb[0].mxu0
    %v1074 = vadd.f32 %v990, %v1073
    %v1075 = vpop.f32.mrb[0].mxu0
    %1076 = vmatprep.mubr.f32.mxu0 0.0
    %1077 = vmatmul.mubr.f32.gmra.mrb[0].mxu0 %v965
    %v1078 = vpop.f32.mrb[0].mxu0
    %v1079 = vadd.f32 %v990, %v1078
    %v1080 = vpop.f32.mrb[0].mxu0
    %1081 = vmatprep.mubr.f32.mxu0 0.0
    %1082 = vmatmul.mubr.f32.gmra.mrb[0].mxu0 %v966
    %v1083 = vpop.f32.mrb[0].mxu0
    %v1084 = vadd.f32 %v990, %v1083
    %v1085 = vpop.f32.mrb[0].mxu0
    %1086 = vmatprep.mubr.f32.mxu0 0.0
    %1087 = vmatmul.mubr.f32.gmra.mrb[0].mxu0 %v967
    %v1088 = vpop.f32.mrb[0].mxu0
    %v1089 = vadd.f32 %v990, %v1088
    %v1090 = vpop.f32.mrb[0].mxu0
    %1091 = vmatprep.mubr.f32.mxu0 0.0
    %1092 = vmatmul.mubr.f32.gmra.mrb[0].mxu0 %v968
    %v1093 = vpop.f32.mrb[0].mxu0
    %v1094 = vadd.f32 %v990, %v1093
    %v1095 = vpop.f32.mrb[0].mxu0
    %1096 = vdwg.mxu0
    %v1097 = vtanh.pop %v1059
    %v1098 = vtanh.pop %v1064
    %v1099 = vtanh.pop %v1069
    %v1100 = vtanh.pop %v1074
    %v1101 = vtanh.pop %v1079
    %v1102 = vtanh.pop %v1084
    %v1103 = vtanh.pop %v1089
    %v1104 = vtanh.pop %v1094
    %1105 = vst [vmem:[#allocation8] sm:$0xff] %v1097
    %1106 = vst [vmem:[#allocation8 + $0x8] sm:$0xff] %v1098
    %1107 = vst [vmem:[#allocation8 + $0x10] sm:$0xff] %v1099
    %1108 = vst [vmem:[#allocation8 + $0x18] sm:$0xff] %v1100
    %1109 = vst [vmem:[#allocation8 + $0x20] sm:$0xff] %v1101
    %1110 = vst [vmem:[#allocation8 + $0x28] sm:$0xff] %v1102
    %1111 = vst [vmem:[#allocation8 + $0x30] sm:$0xff] %v1103
    %1112 = vst [vmem:[#allocation8 + $0x38] sm:$0xff] %v1104
    // Predicated region
    $region74: #{tpu_custom_call.1} parent=1 // pred_check
      _
    $region75: #{tpu_custom_call.1} parent=1 // pred_check_branch
      %1114 = sbr.rel (0) target = $region77
    $region76: #{tpu_custom_call.1} parent=1 // pred_region
      %s1116 = ssub.s32 1024, 1024
      %1117 = vsyncadd [#allocation4], %s1116
      %s1118 = sshll.u32 [#allocation8], 4
      %s1119 = int_to_ptr.vmem [resolvable:$true] %s1118
      %1124 = dma.vmem_to_hbm [thread:$0]  %s1119, 1024, %s15, [#allocation4], 128, 128, 8
    $region77: #{tpu_custom_call.1} parent=1 // pred_fallthru
      _
    // Predicated region
    $region78: #{tpu_custom_call.1} parent=1 // pred_check
      _
    $region79: #{tpu_custom_call.1} parent=1 // pred_check_branch
      %1126 = sbr.rel (0) target = $region81
    $region80: #{tpu_custom_call.1} parent=1 // pred_region
      %1127 = dma.done [#allocation4], 1024
    $region81: #{tpu_custom_call.1} parent=1 // pred_fallthru
      _
    %1128 = vsyncpa [#allocation3], 1
    %1129 = vsyncpa [#allocation6], 1
    %1130 = vsyncpa [#allocation4], 1

</llo_original>
